<compile_context>
chip_gen: v7x
topology: tpu7x:2x2x1
jax: 0.10.0
libtpu: 0.0.40
codegen_flags: <defaults>
</compile_context>

<pallas_src>
import functools
import math

import jax
import jax.numpy as jnp
from jax.experimental import pallas as pl
from jax.experimental.pallas import tpu as pltpu


# Matmul (MXU) input dtype. Set to jnp.float32 to recover exact-f32 matmuls.
COMPUTE_DTYPE = jnp.bfloat16

# Flipped to False (once) if pipeline_mode=pl.Buffered(1) is rejected by this
# JAX / Mosaic build; later calls then use default double buffering.
_SINGLE_BUFFER_OK = True


def _round_up(x, m):
    return (x + m - 1) // m * m


@functools.lru_cache(maxsize=None)
def _vmem_limit_bytes():
    """Generation-aware scoped-VMEM limit: ~75% of physical per-core VMEM,
    capped at 100 MiB (v5e/v6e: 96 MiB, v7x: 48 MiB, unknown: 48 MiB)."""
    cap = None
    try:
        cap = getattr(pltpu.get_tpu_info(), "vmem_capacity_bytes", None)
    except Exception:
        cap = None
    if not cap:
        cap = 64 * 1024 * 1024
    return int(min(cap * 3 // 4, 100 * 1024 * 1024))


def _invariant_spec(block_shape, index_map, single_buffer):
    """BlockSpec for a grid-invariant operand (constant index_map): hold it once
    in VMEM instead of double-buffering an identical re-fetch every grid step."""
    if single_buffer:
        return pl.BlockSpec(block_shape, index_map, pipeline_mode=pl.Buffered(1))
    return pl.BlockSpec(block_shape, index_map)


def _call_with_invariant_buffering(build):
    """build(single_buffer: bool) -> result.  Falls back to double-buffered
    invariant operands if pl.Buffered(1) fails to construct / lower here."""
    global _SINGLE_BUFFER_OK
    if _SINGLE_BUFFER_OK:
        try:
            return build(True)
        except Exception:
            _SINGLE_BUFFER_OK = False
    return build(False)


# ----------------------------------------------------------------------------
# Generic linear kernel: y = x @ w_t + b     (x:(M,K), w_t:(K,N), b:(1,N))
# Tiled over M so large patch batches stream through VMEM double-buffered.
# ----------------------------------------------------------------------------
def _linear_kernel(x_ref, w_ref, b_ref, o_ref):
    o_ref[...] = (
        jnp.dot(x_ref[...].astype(COMPUTE_DTYPE), w_ref[...],
                preferred_element_type=jnp.float32)
        + b_ref[...]
    ).astype(o_ref.dtype)


def pallas_linear(x, w_t, b, *, tile_m=512):
    """y = x @ w_t + b  with x:(M,K) f32, w_t:(K,N) COMPUTE_DTYPE, b:(1,N) f32."""
    M, K = x.shape
    N = w_t.shape[1]
    if M < 8:
        # Tiny matmul (e.g. the token embedding, M = B*num_tokens): a pallas_call
        # here is pure fixed overhead + fully padded vregs — let XLA fuse it.
        return jnp.dot(x.astype(COMPUTE_DTYPE), w_t,
                       preferred_element_type=jnp.float32) + b

    # Pad M up to a whole tile so every output block is full (no ragged masked
    # partial stores on the final block).  Padded rows are zeros, sliced off.
    tm = min(tile_m, _round_up(M, 8))
    m_pad = _round_up(M, tm)
    xp = jnp.pad(x, ((0, m_pad - M), (0, 0))) if m_pad != M else x

    def build(single_buffer):
        return pl.pallas_call(
            _linear_kernel,
            out_shape=jax.ShapeDtypeStruct((m_pad, N), jnp.float32),
            grid=(m_pad // tm,),
            in_specs=[
                pl.BlockSpec((tm, K), lambda i: (i, 0)),
                _invariant_spec((K, N), lambda i: (0, 0), single_buffer),
                _invariant_spec((1, N), lambda i: (0, 0), single_buffer),
            ],
            out_specs=pl.BlockSpec((tm, N), lambda i: (i, 0)),
            compiler_params=pltpu.CompilerParams(
                dimension_semantics=("parallel",),
                vmem_limit_bytes=_vmem_limit_bytes(),
            ),
        )(xp, w_t, b)

    out = _call_with_invariant_buffering(build)
    return out[:M] if m_pad != M else out


# ----------------------------------------------------------------------------
# GELU, tanh formulation (jnp.tanh executes on the EUP slot, co-issues with MXU).
# TODO(synk): PyTorch nn.GELU() default is the exact erf flavor; tanh-approx
#             differs by up to ~1e-3 (kept per perf review for EUP routing).
# ----------------------------------------------------------------------------
def _gelu_tanh(x):
    c = math.sqrt(2.0 / math.pi)
    return 0.5 * x * (1.0 + jnp.tanh(c * (x + 0.044715 * x * x * x)))


# ----------------------------------------------------------------------------
# Fused transformer block kernel (one batch element per grid step).
#   x_ref:  (1, Np, C) f32 residual stream (Np = padded sequence length)
#   wqkv:   (3C, C) bf16, native (out,in) layout, attention scale folded into Q rows
#   wproj:  (H, hd, C) bf16, projection weight split per input head
#   wfc1:   (C, Hm) bf16, wfc2: (Hm, C) bf16
#   biases / LN params: f32
# ----------------------------------------------------------------------------
def _block_kernel(x_ref, ln1_g, ln1_b, wqkv, wproj, bproj,
                  ln2_g, ln2_b, wfc1, bfc1, wfc2, bfc2, o_ref,
                  *, num_heads, n_valid, eps):
    x = x_ref[0]                                   # (Np, C) f32
    Np, C = x.shape
    hd = C // num_heads
    cdt = COMPUTE_DTYPE

    def layer_norm(v, g, b):
        mu = jnp.mean(v, axis=-1, keepdims=True)
        d = v - mu
        var = jnp.mean(d * d, axis=-1, keepdims=True)
        return d * jax.lax.rsqrt(var + eps) * g + b

    # Additive key mask: padded key rows must not contribute to any softmax.
    if n_valid < Np:
        col = jax.lax.broadcasted_iota(jnp.int32, (1, Np), 1)
        key_bias = jnp.where(col < n_valid, 0.0, -1e30).astype(jnp.float32)
    else:
        key_bias = None

    # --- attention branch ----------------------------------------------------
    h1 = layer_norm(x, ln1_g[...], ln1_b[...]).astype(cdt)            # (Np, C)
    # QKV computed transposed:  wqkv (3C, C) @ h1^T  ->  (3C, Np).  Each head's
    # Q/K/V slab is then a sublane-aligned leading slice (no per-head lane-dim
    # relayout copies, the main cost of the previous per-head loop).
    qkv_t = jax.lax.dot_general(wqkv[...], h1, (((1,), (1,)), ((), ())),
                                preferred_element_type=jnp.float32)   # (3C, Np)
    qkv_t = qkv_t.astype(cdt)

    # TODO(synk): replace the static per-head unroll with one head-batched
    #             (H, ...) dot_general once batched transposed matmuls lower
    #             robustly on all generations.
    y = jnp.zeros((Np, C), jnp.float32)
    for h in range(num_heads):
        qh = qkv_t[h * hd:(h + 1) * hd, :]                    # (hd, Np), scale pre-folded
        kh = qkv_t[C + h * hd: C + (h + 1) * hd, :]           # (hd, Np)
        vh = qkv_t[2 * C + h * hd: 2 * C + (h + 1) * hd, :]   # (hd, Np)
        # s[q, k] = sum_d qh[d, q] * kh[d, k]
        s = jax.lax.dot_general(qh, kh, (((0,), (0,)), ((), ())),
                                preferred_element_type=jnp.float32)   # (Np, Np)
        if key_bias is not None:
            s = s + key_bias
        s = s - jnp.max(s, axis=-1, keepdims=True)
        p = jnp.exp(s)
        p = p * pl.reciprocal(jnp.sum(p, axis=-1, keepdims=True), approx=True)
        # pv[q, d] = sum_k p[q, k] * vh[d, k]
        pv = jax.lax.dot_general(p.astype(cdt), vh, (((1,), (1,)), ((), ())),
                                 preferred_element_type=jnp.float32)  # (Np, hd)
        # Accumulate straight into the output projection (no lane-dim head concat).
        # TODO(synk): on v6e/v7x compare against packing heads to a lane-contiguous
        #             (Np, C) slab + a single K=C projection (K=hd quarter-fills MXU).
        y = y + jnp.dot(pv.astype(cdt), wproj[h],
                        preferred_element_type=jnp.float32)
    x = x + y + bproj[...]                                            # residual 1

    # --- MLP branch -----------------------------------------------------------
    # TODO(synk): for Np >~ 512 on v7x, stream fc1/fc2 over Hm chunks
    #             (pltpu.emit_pipeline) instead of holding the full (Np, Hm)
    #             intermediate plus both MLP weights in VMEM.
    h2 = layer_norm(x, ln2_g[...], ln2_b[...]).astype(cdt)
    m = jnp.dot(h2, wfc1[...], preferred_element_type=jnp.float32) + bfc1[...]
    m = _gelu_tanh(m)
    m = jnp.dot(m.astype(cdt), wfc2[...], preferred_element_type=jnp.float32) + bfc2[...]
    o_ref[0] = (x + m).astype(o_ref.dtype)                            # residual 2


def transformer_block(x, p, *, num_heads, n_valid, eps=1e-5):
    B, Np, C = x.shape
    Hm = p["fc1_w"].shape[1]
    hd = C // num_heads
    kernel = functools.partial(_block_kernel, num_heads=num_heads,
                               n_valid=n_valid, eps=eps)

    # TODO(synk): when B == 1 on v7x add a second "parallel" grid axis (query-row
    #             tiles) so the second TensorCore gets work; with B >= 2 the
    #             batch axis already feeds both cores.
    # TODO(synk): fuse 2 blocks per pallas_call on v5e/v6e (both blocks' bf16
    #             weights fit VMEM with single buffering) to halve activation
    #             HBM round trips and call overhead.
    def build(single_buffer):
        def inv(shape):
            nd = len(shape)
            return _invariant_spec(shape, lambda b, _nd=nd: (0,) * _nd, single_buffer)

        return pl.pallas_call(
            kernel,
            out_shape=jax.ShapeDtypeStruct((B, Np, C), jnp.float32),
            grid=(B,),
            in_specs=[
                pl.BlockSpec((1, Np, C), lambda b: (b, 0, 0)),   # x (double-buffered)
                inv((1, C)),                                     # ln1 gamma
                inv((1, C)),                                     # ln1 beta
                inv((3 * C, C)),                                 # qkv weight (native, Q-scaled)
                inv((num_heads, hd, C)),                         # proj weight per head
                inv((1, C)),                                     # proj bias
                inv((1, C)),                                     # ln2 gamma
                inv((1, C)),                                     # ln2 beta
                inv((C, Hm)),                                    # fc1 weight
                inv((1, Hm)),                                    # fc1 bias
                inv((Hm, C)),                                    # fc2 weight
                inv((1, C)),                                     # fc2 bias
            ],
            out_specs=pl.BlockSpec((1, Np, C), lambda b: (b, 0, 0)),
            compiler_params=pltpu.CompilerParams(
                dimension_semantics=("parallel",),
                vmem_limit_bytes=_vmem_limit_bytes(),
            ),
        )(x, p["ln1_g"], p["ln1_b"], p["qkv_w"], p["proj_w"], p["proj_b"],
          p["ln2_g"], p["ln2_b"], p["fc1_w"], p["fc1_b"], p["fc2_w"], p["fc2_b"])

    return _call_with_invariant_buffering(build)


# ----------------------------------------------------------------------------
# Parameter init (deterministic, mirrors the module's trunc_normal(std=0.02)).
# Matmul weights stored in COMPUTE_DTYPE (bf16); LN/bias/pos kept in f32.
# ----------------------------------------------------------------------------
def _tn(key, shape, std=0.02):
    return (std * jax.random.truncated_normal(key, -2.0, 2.0, shape)).astype(jnp.float32)


def init_params(key, *, patch_dim, token_dim, embed_dim, depth, mlp_ratio,
                num_patches, num_tokens, num_heads):
    hidden = int(embed_dim * mlp_ratio)
    hd = embed_dim // num_heads
    scale = hd ** -0.5                       # scale_head=True in the reference
    keys = jax.random.split(key, 4 + depth)
    params = {
        # patch embedding Linear(patch_dim -> embed_dim); stored pre-transposed (K, N)
        "patch_w": _tn(keys[0], (patch_dim, embed_dim)).astype(COMPUTE_DTYPE),
        "patch_b": jnp.zeros((1, embed_dim), jnp.float32),
        # token embedding Linear(token_dim -> embed_dim)
        # TODO(synk): reference accepts an arbitrary user-supplied token_embedding;
        #             a single Linear is used here.
        "tok_w": _tn(keys[1], (token_dim, embed_dim)).astype(COMPUTE_DTYPE),
        "tok_b": jnp.zeros((1, embed_dim), jnp.float32),
        # learnable positional encoding
        "pos": _tn(keys[2], (1, num_patches + num_tokens, embed_dim)),
        "blocks": [],
    }
    for d in range(depth):
        bkeys = jax.random.split(keys[4 + d], 4)
        # qkv weight kept in PyTorch-native (out_features, in_features) = (3C, C)
        # layout so the kernel can compute the transposed QKV directly (NT matmul);
        # the attention scale is folded into the Q rows (bias=False in reference).
        qkv_w = _tn(bkeys[0], (3 * embed_dim, embed_dim))
        qkv_w = qkv_w.at[:embed_dim, :].multiply(scale)
        proj_w = _tn(bkeys[1], (embed_dim, embed_dim)).reshape(num_heads, hd, embed_dim)
        params["blocks"].append({
            "ln1_g": jnp.ones((1, embed_dim), jnp.float32),
            "ln1_b": jnp.zeros((1, embed_dim), jnp.float32),
            "qkv_w": qkv_w.astype(COMPUTE_DTYPE),
            "proj_w": proj_w.astype(COMPUTE_DTYPE),
            "proj_b": jnp.zeros((1, embed_dim), jnp.float32),
            "ln2_g": jnp.ones((1, embed_dim), jnp.float32),
            "ln2_b": jnp.zeros((1, embed_dim), jnp.float32),
            "fc1_w": _tn(bkeys[2], (embed_dim, hidden)).astype(COMPUTE_DTYPE),
            "fc1_b": jnp.zeros((1, hidden), jnp.float32),
            "fc2_w": _tn(bkeys[3], (hidden, embed_dim)).astype(COMPUTE_DTYPE),
            "fc2_b": jnp.zeros((1, embed_dim), jnp.float32),
        })
    return params


# ----------------------------------------------------------------------------
# Full forward (matches VisionTransformer.forward, eval mode)
# ----------------------------------------------------------------------------
def vision_transformer_forward(params, x, additional_vectors, *,
                               patch_size, num_heads, num_tokens):
    B, Cin, H, W = x.shape
    P = patch_size
    hp, wp = H // P, W // P
    num_patches = hp * wp
    embed_dim = params["patch_w"].shape[1]

    # PatchEmbed (embed_type='linear'):
    # rearrange 'b c (h p1) (w p2) -> b (h w) (p1 p2 c)' then Linear
    xr = x.reshape(B, Cin, hp, P, wp, P)
    xr = xr.transpose(0, 2, 4, 3, 5, 1)                      # (B, h, w, p1, p2, c)
    xr = xr.reshape(B * num_patches, P * P * Cin)
    patch_tok = pallas_linear(xr, params["patch_w"], params["patch_b"])
    patch_tok = patch_tok.reshape(B, num_patches, embed_dim)

    # token embedding of additional vectors (M = B*num_tokens is tiny, so
    # pallas_linear falls back to a plain fused jnp.dot — no pallas_call overhead)
    tok_in = additional_vectors.reshape(B * num_tokens, -1)
    tok = pallas_linear(tok_in, params["tok_w"], params["tok_b"])
    tok = tok.reshape(B, num_tokens, embed_dim)

    # learnable pos encoding: cat(tokens, patches) then add
    xs = jnp.concatenate([tok, patch_tok], axis=1) + params["pos"]
    # pos_drop / dropout / drop_path: eval mode (p=0) -> identity

    # Pad sequence length to a multiple of 8 for dense sublane tiles inside the
    # block kernels; padded keys are masked in-kernel, padded rows sliced off.
    n = num_tokens + num_patches
    n_pad = ((n + 7) // 8) * 8
    if n_pad != n:
        xs = jnp.pad(xs, ((0, 0), (0, n_pad - n), (0, 0)))

    for blk in params["blocks"]:
        xs = transformer_block(xs, blk, num_heads=num_heads, n_valid=n)

    # return x[:, 0:-num_patches]  -> the non-visual tokens
    return xs[:, :num_tokens]


# ----------------------------------------------------------------------------
if __name__ == "__main__":
    # Small config consistent with the module
    B = 2
    Hin = Win = 16
    Cin = 4
    patch_size = 4
    embed_dim = 32
    depth = 2
    num_heads = 4
    mlp_ratio = 4.0
    num_tokens = 1
    token_dim = 8

    num_patches = (Hin // patch_size) * (Win // patch_size)
    patch_dim = Cin * patch_size * patch_size

    key = jax.random.PRNGKey(0)
    k_params, k_x, k_add = jax.random.split(key, 3)

    params = init_params(
        k_params,
        patch_dim=patch_dim,
        token_dim=token_dim,
        embed_dim=embed_dim,
        depth=depth,
        mlp_ratio=mlp_ratio,
        num_patches=num_patches,
        num_tokens=num_tokens,
        num_heads=num_heads,
    )

    x = jax.random.normal(k_x, (B, Cin, Hin, Win), jnp.float32)           # NCHW
    additional_vectors = jax.random.normal(k_add, (B, num_tokens, token_dim), jnp.float32)

    out = vision_transformer_forward(
        params, x, additional_vectors,
        patch_size=patch_size, num_heads=num_heads, num_tokens=num_tokens,
    )
    out = jax.block_until_ready(out)
    assert out.shape == (B, num_tokens, embed_dim), out.shape
    assert bool(jnp.all(jnp.isfinite(out))), "non-finite output"
    print("KERNEL_OK")
</pallas_src>

<mosaic_0001>
module attributes {stable_mosaic.version = 11 : i64} {
  func.func @_linear_kernel(%arg0: i32, %arg1: memref<32x64xf32, #tpu.memory_space<vmem>>, %arg2: memref<64x32xbf16, #tpu.memory_space<vmem>>, %arg3: memref<1x32xf32, #tpu.memory_space<vmem>>, %arg4: memref<32x32xf32, #tpu.memory_space<vmem>>) attributes {dimension_semantics = [#tpu.dimension_semantics<parallel>], iteration_bounds = array<i64: 1>, scalar_prefetch = 0 : i64, scratch_operands = 0 : i64, tpu.core_type = #tpu.core_type<tc>, window_params = [{transform_indices = @transform_0, window_bounds = array<i64: 32, 64>}, {pipeline_mode = #tpu.pipeline_mode<synchronous>, transform_indices = @transform_1, window_bounds = array<i64: 64, 32>}, {pipeline_mode = #tpu.pipeline_mode<synchronous>, transform_indices = @transform_2, window_bounds = array<i64: 1, 32>}, {transform_indices = @transform_3, window_bounds = array<i64: 32, 32>}]} {
    %c0 = arith.constant 0 : index
    %c0_0 = arith.constant 0 : index
    %0 = vector.load %arg1[%c0, %c0_0] : memref<32x64xf32, #tpu.memory_space<vmem>>, vector<32x64xf32>
    %1 = arith.truncf %0 : vector<32x64xf32> to vector<32x64xbf16>
    %c0_1 = arith.constant 0 : index
    %c0_2 = arith.constant 0 : index
    %2 = vector.load %arg2[%c0_1, %c0_2] : memref<64x32xbf16, #tpu.memory_space<vmem>>, vector<64x32xbf16>
    %cst = arith.constant dense<0.000000e+00> : vector<32x32xf32>
    %3 = tpu.matmul %1, %2, %cst {dimension_numbers = #tpu.dot_dimension_numbers<[1], [0], [0], [1], [0, 0, 1, 1], [], []>} : vector<32x64xbf16>, vector<64x32xbf16>, vector<32x32xf32> -> vector<32x32xf32>
    %c0_3 = arith.constant 0 : index
    %c0_4 = arith.constant 0 : index
    %4 = vector.load %arg3[%c0_3, %c0_4] : memref<1x32xf32, #tpu.memory_space<vmem>>, vector<1x32xf32>
    %5 = vector.broadcast %4 : vector<1x32xf32> to vector<32x32xf32>
    %6 = arith.addf %3, %5 : vector<32x32xf32>
    %c0_5 = arith.constant 0 : index
    %c0_6 = arith.constant 0 : index
    %7 = vector.load %arg4[%c0_5, %c0_6] : memref<32x32xf32, #tpu.memory_space<vmem>>, vector<32x32xf32>
    tpu.vector_store %arg4[%c0_5, %c0_6], %6 {strides = array<i32>} : memref<32x32xf32, #tpu.memory_space<vmem>>, vector<32x32xf32>,
    return
  }
  func.func @transform_0(%arg0: i32) -> (i32, i32) {
    %c0_i32 = arith.constant 0 : i32
    %c0_i32_0 = arith.constant 0 : i32
    return %arg0, %c0_i32 : i32, i32
  }
  func.func @transform_1(%arg0: i32) -> (i32, i32) {
    %c0_i32 = arith.constant 0 : i32
    %c0_i32_0 = arith.constant 0 : i32
    %c0_i32_1 = arith.constant 0 : i32
    return %c0_i32, %c0_i32_0 : i32, i32
  }
  func.func @transform_2(%arg0: i32) -> (i32, i32) {
    %c0_i32 = arith.constant 0 : i32
    %c0_i32_0 = arith.constant 0 : i32
    %c0_i32_1 = arith.constant 0 : i32
    return %c0_i32, %c0_i32_0 : i32, i32
  }
  func.func @transform_3(%arg0: i32) -> (i32, i32) {
    %c0_i32 = arith.constant 0 : i32
    %c0_i32_0 = arith.constant 0 : i32
    return %arg0, %c0_i32 : i32, i32
  }
}

module attributes {stable_mosaic.version = 11 : i64} {
  func.func @_linear_kernel(%arg0: i32, %arg1: memref<32x64xf32, #tpu.memory_space<vmem>>, %arg2: memref<64x32xbf16, #tpu.memory_space<vmem>>, %arg3: memref<1x32xf32, #tpu.memory_space<vmem>>, %arg4: memref<32x32xf32, #tpu.memory_space<vmem>>) attributes {dimension_semantics = [#tpu.dimension_semantics<parallel>], iteration_bounds = array<i64: 1>, scalar_prefetch = 0 : i64, scratch_operands = 0 : i64, tpu.core_type = #tpu.core_type<tc>, window_params = [{transform_indices = @transform_0, window_bounds = array<i64: 32, 64>}, {pipeline_mode = #tpu.pipeline_mode<synchronous>, transform_indices = @transform_1, window_bounds = array<i64: 64, 32>}, {pipeline_mode = #tpu.pipeline_mode<synchronous>, transform_indices = @transform_2, window_bounds = array<i64: 1, 32>}, {transform_indices = @transform_3, window_bounds = array<i64: 32, 32>}]} {
    %c0 = arith.constant 0 : index
    %c0_0 = arith.constant 0 : index
    %0 = vector.load %arg1[%c0, %c0_0] : memref<32x64xf32, #tpu.memory_space<vmem>>, vector<32x64xf32>
    %1 = arith.truncf %0 : vector<32x64xf32> to vector<32x64xbf16>
    %c0_1 = arith.constant 0 : index
    %c0_2 = arith.constant 0 : index
    %2 = vector.load %arg2[%c0_1, %c0_2] : memref<64x32xbf16, #tpu.memory_space<vmem>>, vector<64x32xbf16>
    %cst = arith.constant dense<0.000000e+00> : vector<32x32xf32>
    %3 = tpu.matmul %1, %2, %cst {dimension_numbers = #tpu.dot_dimension_numbers<[1], [0], [0], [1], [0, 0, 1, 1], [], []>} : vector<32x64xbf16>, vector<64x32xbf16>, vector<32x32xf32> -> vector<32x32xf32>
    %c0_3 = arith.constant 0 : index
    %c0_4 = arith.constant 0 : index
    %4 = vector.load %arg3[%c0_3, %c0_4] : memref<1x32xf32, #tpu.memory_space<vmem>>, vector<1x32xf32>
    %5 = vector.broadcast %4 : vector<1x32xf32> to vector<32x32xf32>
    %6 = arith.addf %3, %5 : vector<32x32xf32>
    %c0_5 = arith.constant 0 : index
    %c0_6 = arith.constant 0 : index
    %7 = vector.load %arg4[%c0_5, %c0_6] : memref<32x32xf32, #tpu.memory_space<vmem>>, vector<32x32xf32>
    tpu.vector_store %arg4[%c0_5, %c0_6], %6 {strides = array<i32>} : memref<32x32xf32, #tpu.memory_space<vmem>>, vector<32x32xf32>,
    return
  }
  func.func @transform_0(%arg0: i32) -> (i32, i32) {
    %c0_i32 = arith.constant 0 : i32
    %c0_i32_0 = arith.constant 0 : i32
    return %arg0, %c0_i32 : i32, i32
  }
  func.func @transform_1(%arg0: i32) -> (i32, i32) {
    %c0_i32 = arith.constant 0 : i32
    %c0_i32_0 = arith.constant 0 : i32
    %c0_i32_1 = arith.constant 0 : i32
    return %c0_i32, %c0_i32_0 : i32, i32
  }
  func.func @transform_2(%arg0: i32) -> (i32, i32) {
    %c0_i32 = arith.constant 0 : i32
    %c0_i32_0 = arith.constant 0 : i32
    %c0_i32_1 = arith.constant 0 : i32
    return %c0_i32, %c0_i32_0 : i32, i32
  }
  func.func @transform_3(%arg0: i32) -> (i32, i32) {
    %c0_i32 = arith.constant 0 : i32
    %c0_i32_0 = arith.constant 0 : i32
    return %arg0, %c0_i32 : i32, i32
  }
}

</mosaic_0001>

<llo_original>
// kernel: tpu_custom_call.1
$region0: #{tpu_custom_call.1}
  #allocation0 [shape = 'u32[]', space=smem, size = 0x4, offset = 0x4, fixed_abs, tag = 'smem constant byte address 0x4 - core index']
  #allocation1 [shape = 'u32[144,128]{1,0:T(1,128)}', space=vmem, size = 0x12000, scoped, tag = 'internal scratch']
  %s0 = inlined_call_operand.vmem [shape: f32[32,64], index: 0, kind: input, shape index: {}]
  %s1 = inlined_call_operand.vmem [shape: bf16[64,32], index: 1, kind: input, shape index: {}]
  %s2 = inlined_call_operand.vmem [shape: f32[1,32], index: 2, kind: input, shape index: {}]
  %s3 = inlined_call_operand.hbm [shape: f32[32,32], index: 3, kind: output, shape index: {}]
  %s4 = sld [smem:[#allocation0]]
  $region22: #{tpu_custom_call.1} parent=0
    _
  %s6 = ssub.s32 1, %s4
  %s7 = scalar_select 0, %s6, %s4
  $region1: #{tpu_custom_call.1} parent=0
    #allocation2 [shape = 'u8[16384]{0}', space=vmem, size = 0x4000, scoped, tag = 'output window, operand 0, single buffered']
    #allocation3 [shape = 's32[1]{0}', space=sflag, size = 0x4, scoped, tag = 'scoped memory for tpu_custom_call.1']
    %8 = vsyncpa [#allocation3], 0
    // Predicated region
    $region2: #{tpu_custom_call.1} parent=1 // pred_check
      _
    $region3: #{tpu_custom_call.1} parent=1 // pred_check_branch
      %10 = sbr.rel (0) target = $region5
    $region4: #{tpu_custom_call.1} parent=1 // pred_region
      _
    $region5: #{tpu_custom_call.1} parent=1 // pred_fallthru
      _
    // Predicated region
    $region6: #{tpu_custom_call.1} parent=1 // pred_check
      _
    $region7: #{tpu_custom_call.1} parent=1 // pred_check_branch
      %12 = sbr.rel (0) target = $region9
    $region8: #{tpu_custom_call.1} parent=1 // pred_region
      _
    $region9: #{tpu_custom_call.1} parent=1 // pred_fallthru
      _
    // Predicated region
    $region10: #{tpu_custom_call.1} parent=1 // pred_check
      _
    $region11: #{tpu_custom_call.1} parent=1 // pred_check_branch
      %14 = sbr.rel (0) target = $region13
    $region12: #{tpu_custom_call.1} parent=1 // pred_region
      _
    $region13: #{tpu_custom_call.1} parent=1 // pred_fallthru
      _
    %v16 = vld [vmem:[%s0] sm:$0xff]
    %v17 = vld [vmem:[%s0 + $0x8] sm:$0xff]
    %v18 = vld [vmem:[%s0 + $0x10] sm:$0xff]
    %v19 = vld [vmem:[%s0 + $0x18] sm:$0xff]
    %v20 = vpack.c.bf16 %v17, %v16
    %v21 = vpack.c.bf16 %v19, %v18
    %v22 = vld [vmem:[%s1] sm:$0xf]
    %v23 = vld [vmem:[%s1 + $0x4] sm:$0xf]
    %v24 = vld [vmem:[%s1 + $0x8] sm:$0xf]
    %v25 = vld [vmem:[%s1 + $0xc] sm:$0xf]
    %v26 = vld [vmem:[%s1 + $0x10] sm:$0xf]
    %v27 = vld [vmem:[%s1 + $0x14] sm:$0xf]
    %v28 = vld [vmem:[%s1 + $0x18] sm:$0xf]
    %v29 = vld [vmem:[%s1 + $0x1c] sm:$0xf]
    %v30 = vld [vmem:[%s2] sm:$0x1]
    %v32 = vlaneseq
    %v33 = vshrl.u32 %v32, 7
    %v34 = vsub.s32 0, %v33
    %v35 = vrot.slane %v30, %v34
    %v45 = vunpack.c.l.b16 %v22
    %v46 = vunpack.c.l.b16 %v23
    %v47 = vunpack.c.l.b16 %v24
    %v48 = vunpack.c.l.b16 %v25
    %v49 = vunpack.c.l.b16 %v26
    %v50 = vunpack.c.l.b16 %v27
    %v51 = vunpack.c.l.b16 %v28
    %v52 = vunpack.c.l.b16 %v29
    %v53 = vpack.c.b16 %v46, %v45
    %v54 = vpack.c.b16 %v48, %v47
    %v55 = vpack.c.b16 %v50, %v49
    %v56 = vpack.c.b16 %v52, %v51
    %vm61 = vcmask 523264
    %v63 = vsel %vm61, %v20, 0
    %v66 = vsel %vm61, %v21, 0
    %68 = vmatprep.subr.bf16.mxu0 0
    %69 = vmatpush1.bf16.msra.mxu0 %v53
    %70 = vmatprep.subr.bf16.mxu0 0
    %71 = vmatpush1.bf16.msra.mxu0 %v54
    %72 = vmatprep.subr.bf16.mxu0 0
    %73 = vmatpush1.bf16.msra.mxu0 %v55
    %74 = vmatprep.subr.bf16.mxu0 0
    %75 = vmatpush1.bf16.msra.mxu0 %v56
    %76 = vmatprep.subr.bf16.mxu0 0
    %77 = vmatpush1.bf16.msra.mxu0 0
    %78 = vmatprep.subr.bf16.mxu0 0
    %79 = vmatpush1.bf16.msra.mxu0 0
    %80 = vmatprep.subr.bf16.mxu0 0
    %81 = vmatpush1.bf16.msra.mxu0 0
    %82 = vmatprep.subr.bf16.mxu0 0
    %83 = vmatpush1.bf16.msra.mxu0 0
    %84 = vmatprep.subr.bf16.mxu0 0
    %85 = vmatpush1.bf16.msra.mxu0 0
    %86 = vmatprep.subr.bf16.mxu0 0
    %87 = vmatpush1.bf16.msra.mxu0 0
    %88 = vmatprep.subr.bf16.mxu0 0
    %89 = vmatpush1.bf16.msra.mxu0 0
    %90 = vmatprep.subr.bf16.mxu0 0
    %91 = vmatpush1.bf16.msra.mxu0 0
    %92 = vmatprep.subr.bf16.mxu0 0
    %93 = vmatpush1.bf16.msra.mxu0 0
    %94 = vmatprep.subr.bf16.mxu0 0
    %95 = vmatpush1.bf16.msra.mxu0 0
    %96 = vmatprep.subr.bf16.mxu0 0
    %97 = vmatpush1.bf16.msra.mxu0 0
    %98 = vmatprep.subr.bf16.mxu0 0
    %99 = vmatpush1.bf16.msra.mxu0 0
    %100 = vmatprep.mubr.bf16.mxu0 0
    %101 = vmatmul.mubr.bf16.gmra.mrb[0].mxu0 %v63
    %v102 = vpop.f32.mrb[0].mxu0
    %v103 = vadd.f32 %v35, %v102
    %v104 = vpop.f32.mrb[0].mxu0
    %v105 = vpop.f32.mrb[0].mxu0
    %v106 = vadd.f32 %v35, %v105
    %v107 = vpop.f32.mrb[0].mxu0
    %108 = vmatprep.mubr.bf16.mxu0 0
    %109 = vmatmul.mubr.bf16.gmra.mrb[0].mxu0 %v66
    %v110 = vpop.f32.mrb[0].mxu0
    %v111 = vadd.f32 %v35, %v110
    %v112 = vpop.f32.mrb[0].mxu0
    %v113 = vpop.f32.mrb[0].mxu0
    %v114 = vadd.f32 %v35, %v113
    %v115 = vpop.f32.mrb[0].mxu0
    %116 = vdwg.mxu0
    %vm117 = vcmask 261120
    %118 = vst.msk [vmem:[#allocation2] sm:$0xff] %vm117, %v103
    %119 = vst.msk [vmem:[#allocation2 + $0x8] sm:$0xff] %vm117, %v106
    %120 = vst.msk [vmem:[#allocation2 + $0x10] sm:$0xff] %vm117, %v111
    %121 = vst.msk [vmem:[#allocation2 + $0x18] sm:$0xff] %vm117, %v114
    // Predicated region
    $region14: #{tpu_custom_call.1} parent=1 // pred_check
      _
    $region15: #{tpu_custom_call.1} parent=1 // pred_check_branch
      %123 = sbr.rel (0) target = $region17
    $region16: #{tpu_custom_call.1} parent=1 // pred_region
      %s125 = ssub.s32 512, 512
      %126 = vsyncadd [#allocation3], %s125
      %s127 = sshll.u32 [#allocation2], 4
      %s128 = int_to_ptr.vmem [resolvable:$true] %s127
      %133 = dma.vmem_to_hbm [thread:$0]  %s128, 512, %s3, [#allocation3], 128, 128, 8
    $region17: #{tpu_custom_call.1} parent=1 // pred_fallthru
      _
    // Predicated region
    $region18: #{tpu_custom_call.1} parent=1 // pred_check
      _
    $region19: #{tpu_custom_call.1} parent=1 // pred_check_branch
      %135 = sbr.rel (0) target = $region21
    $region20: #{tpu_custom_call.1} parent=1 // pred_region
      %136 = dma.done [#allocation3], 512
    $region21: #{tpu_custom_call.1} parent=1 // pred_fallthru
      _
    %137 = vsyncpa [#allocation3], 1

// kernel: tpu_custom_call.1
$region0: #{tpu_custom_call.1}
  #allocation0 [shape = 'u32[]', space=smem, size = 0x4, offset = 0x4, fixed_abs, tag = 'smem constant byte address 0x4 - core index']
  #allocation1 [shape = 'u32[144,128]{1,0:T(1,128)}', space=vmem, size = 0x12000, scoped, tag = 'internal scratch']
  %s0 = inlined_call_operand.vmem [shape: f32[32,64], index: 0, kind: input, shape index: {}]
  %s1 = inlined_call_operand.vmem [shape: bf16[64,32], index: 1, kind: input, shape index: {}]
  %s2 = inlined_call_operand.vmem [shape: f32[1,32], index: 2, kind: input, shape index: {}]
  %s3 = inlined_call_operand.hbm [shape: f32[32,32], index: 3, kind: output, shape index: {}]
  %s4 = sld [smem:[#allocation0]]
  $region22: #{tpu_custom_call.1} parent=0
    _
  %s6 = ssub.s32 1, %s4
  %s7 = scalar_select 0, %s6, %s4
  $region1: #{tpu_custom_call.1} parent=0
    #allocation2 [shape = 'u8[16384]{0}', space=vmem, size = 0x4000, scoped, tag = 'output window, operand 0, single buffered']
    #allocation3 [shape = 's32[1]{0}', space=sflag, size = 0x4, scoped, tag = 'scoped memory for tpu_custom_call.1']
    %8 = vsyncpa [#allocation3], 0
    // Predicated region
    $region2: #{tpu_custom_call.1} parent=1 // pred_check
      _
    $region3: #{tpu_custom_call.1} parent=1 // pred_check_branch
      %10 = sbr.rel (0) target = $region5
    $region4: #{tpu_custom_call.1} parent=1 // pred_region
      _
    $region5: #{tpu_custom_call.1} parent=1 // pred_fallthru
      _
    // Predicated region
    $region6: #{tpu_custom_call.1} parent=1 // pred_check
      _
    $region7: #{tpu_custom_call.1} parent=1 // pred_check_branch
      %12 = sbr.rel (0) target = $region9
    $region8: #{tpu_custom_call.1} parent=1 // pred_region
      _
    $region9: #{tpu_custom_call.1} parent=1 // pred_fallthru
      _
    // Predicated region
    $region10: #{tpu_custom_call.1} parent=1 // pred_check
      _
    $region11: #{tpu_custom_call.1} parent=1 // pred_check_branch
      %14 = sbr.rel (0) target = $region13
    $region12: #{tpu_custom_call.1} parent=1 // pred_region
      _
    $region13: #{tpu_custom_call.1} parent=1 // pred_fallthru
      _
    %v16 = vld [vmem:[%s0] sm:$0xff]
    %v17 = vld [vmem:[%s0 + $0x8] sm:$0xff]
    %v18 = vld [vmem:[%s0 + $0x10] sm:$0xff]
    %v19 = vld [vmem:[%s0 + $0x18] sm:$0xff]
    %v20 = vpack.c.bf16 %v17, %v16
    %v21 = vpack.c.bf16 %v19, %v18
    %v22 = vld [vmem:[%s1] sm:$0xf]
    %v23 = vld [vmem:[%s1 + $0x4] sm:$0xf]
    %v24 = vld [vmem:[%s1 + $0x8] sm:$0xf]
    %v25 = vld [vmem:[%s1 + $0xc] sm:$0xf]
    %v26 = vld [vmem:[%s1 + $0x10] sm:$0xf]
    %v27 = vld [vmem:[%s1 + $0x14] sm:$0xf]
    %v28 = vld [vmem:[%s1 + $0x18] sm:$0xf]
    %v29 = vld [vmem:[%s1 + $0x1c] sm:$0xf]
    %v30 = vld [vmem:[%s2] sm:$0x1]
    %v32 = vlaneseq
    %v33 = vshrl.u32 %v32, 7
    %v34 = vsub.s32 0, %v33
    %v35 = vrot.slane %v30, %v34
    %v45 = vunpack.c.l.b16 %v22
    %v46 = vunpack.c.l.b16 %v23
    %v47 = vunpack.c.l.b16 %v24
    %v48 = vunpack.c.l.b16 %v25
    %v49 = vunpack.c.l.b16 %v26
    %v50 = vunpack.c.l.b16 %v27
    %v51 = vunpack.c.l.b16 %v28
    %v52 = vunpack.c.l.b16 %v29
    %v53 = vpack.c.b16 %v46, %v45
    %v54 = vpack.c.b16 %v48, %v47
    %v55 = vpack.c.b16 %v50, %v49
    %v56 = vpack.c.b16 %v52, %v51
    %vm61 = vcmask 523264
    %v63 = vsel %vm61, %v20, 0
    %v66 = vsel %vm61, %v21, 0
    %68 = vmatprep.subr.bf16.mxu0 0
    %69 = vmatpush1.bf16.msra.mxu0 %v53
    %70 = vmatprep.subr.bf16.mxu0 0
    %71 = vmatpush1.bf16.msra.mxu0 %v54
    %72 = vmatprep.subr.bf16.mxu0 0
    %73 = vmatpush1.bf16.msra.mxu0 %v55
    %74 = vmatprep.subr.bf16.mxu0 0
    %75 = vmatpush1.bf16.msra.mxu0 %v56
    %76 = vmatprep.subr.bf16.mxu0 0
    %77 = vmatpush1.bf16.msra.mxu0 0
    %78 = vmatprep.subr.bf16.mxu0 0
    %79 = vmatpush1.bf16.msra.mxu0 0
    %80 = vmatprep.subr.bf16.mxu0 0
    %81 = vmatpush1.bf16.msra.mxu0 0
    %82 = vmatprep.subr.bf16.mxu0 0
    %83 = vmatpush1.bf16.msra.mxu0 0
    %84 = vmatprep.subr.bf16.mxu0 0
    %85 = vmatpush1.bf16.msra.mxu0 0
    %86 = vmatprep.subr.bf16.mxu0 0
    %87 = vmatpush1.bf16.msra.mxu0 0
    %88 = vmatprep.subr.bf16.mxu0 0
    %89 = vmatpush1.bf16.msra.mxu0 0
    %90 = vmatprep.subr.bf16.mxu0 0
    %91 = vmatpush1.bf16.msra.mxu0 0
    %92 = vmatprep.subr.bf16.mxu0 0
    %93 = vmatpush1.bf16.msra.mxu0 0
    %94 = vmatprep.subr.bf16.mxu0 0
    %95 = vmatpush1.bf16.msra.mxu0 0
    %96 = vmatprep.subr.bf16.mxu0 0
    %97 = vmatpush1.bf16.msra.mxu0 0
    %98 = vmatprep.subr.bf16.mxu0 0
    %99 = vmatpush1.bf16.msra.mxu0 0
    %100 = vmatprep.mubr.bf16.mxu0 0
    %101 = vmatmul.mubr.bf16.gmra.mrb[0].mxu0 %v63
    %v102 = vpop.f32.mrb[0].mxu0
    %v103 = vadd.f32 %v35, %v102
    %v104 = vpop.f32.mrb[0].mxu0
    %v105 = vpop.f32.mrb[0].mxu0
    %v106 = vadd.f32 %v35, %v105
    %v107 = vpop.f32.mrb[0].mxu0
    %108 = vmatprep.mubr.bf16.mxu0 0
    %109 = vmatmul.mubr.bf16.gmra.mrb[0].mxu0 %v66
    %v110 = vpop.f32.mrb[0].mxu0
    %v111 = vadd.f32 %v35, %v110
    %v112 = vpop.f32.mrb[0].mxu0
    %v113 = vpop.f32.mrb[0].mxu0
    %v114 = vadd.f32 %v35, %v113
    %v115 = vpop.f32.mrb[0].mxu0
    %116 = vdwg.mxu0
    %vm117 = vcmask 261120
    %118 = vst.msk [vmem:[#allocation2] sm:$0xff] %vm117, %v103
    %119 = vst.msk [vmem:[#allocation2 + $0x8] sm:$0xff] %vm117, %v106
    %120 = vst.msk [vmem:[#allocation2 + $0x10] sm:$0xff] %vm117, %v111
    %121 = vst.msk [vmem:[#allocation2 + $0x18] sm:$0xff] %vm117, %v114
    // Predicated region
    $region14: #{tpu_custom_call.1} parent=1 // pred_check
      _
    $region15: #{tpu_custom_call.1} parent=1 // pred_check_branch
      %123 = sbr.rel (0) target = $region17
    $region16: #{tpu_custom_call.1} parent=1 // pred_region
      %s125 = ssub.s32 512, 512
      %126 = vsyncadd [#allocation3], %s125
      %s127 = sshll.u32 [#allocation2], 4
      %s128 = int_to_ptr.vmem [resolvable:$true] %s127
      %133 = dma.vmem_to_hbm [thread:$0]  %s128, 512, %s3, [#allocation3], 128, 128, 8
    $region17: #{tpu_custom_call.1} parent=1 // pred_fallthru
      _
    // Predicated region
    $region18: #{tpu_custom_call.1} parent=1 // pred_check
      _
    $region19: #{tpu_custom_call.1} parent=1 // pred_check_branch
      %135 = sbr.rel (0) target = $region21
    $region20: #{tpu_custom_call.1} parent=1 // pred_region
      %136 = dma.done [#allocation3], 512
    $region21: #{tpu_custom_call.1} parent=1 // pred_fallthru
      _
    %137 = vsyncpa [#allocation3], 1

</llo_original>
